<compile_context>
chip_gen: v5e
topology: v5e:2x2
jax: 0.10.0
libtpu: 0.0.40
codegen_flags: <defaults>
</compile_context>

<pallas_src>
import jax
import jax.numpy as jnp
from jax.experimental import pallas as pl
from jax.experimental.pallas import tpu as pltpu

_LANES = 128                 # vreg lane width
_DEFAULT_BLOCK_ROWS = 2048   # 2048 x 128 x 4B = 1 MiB f32 block (roofline sweet spot)
_FAST_PATH_ELEMS = 1 << 18   # below this, a fused XLA add beats pallas_call overhead


def _round_up(x: int, m: int) -> int:
    return ((x + m - 1) // m) * m


def _sublane_multiple(dtype) -> int:
    """Minimum sublane granularity for a (rows, 128) tile of this dtype."""
    bits = jnp.dtype(dtype).itemsize * 8
    return max(8, 256 // bits)       # 8 (f32), 16 (bf16/f16), 32 (int8/fp8)


def _add_kernel(v_ref, u_ref, o_ref):
    # Elementwise hot path on a lane-dense (block_rows, 128) tile.
    o_ref[...] = v_ref[...] + u_ref[...]


def to_slab(x: jax.Array) -> jax.Array:
    """One-time layout conversion: arbitrary shape -> lane-dense (rows, 128) slab."""
    total = int(x.size)
    sub = _sublane_multiple(x.dtype)
    rows = _round_up(pl.cdiv(total, _LANES), sub)
    pad = rows * _LANES - total
    return jnp.pad(x.reshape(-1), (0, pad)).reshape(rows, _LANES)


def from_slab(slab: jax.Array, total: int, shape) -> jax.Array:
    """Off-hot-path view back to the original (e.g. (N, 3)) layout."""
    return slab.reshape(-1)[:total].reshape(shape)


def slab_add(v_slab: jax.Array, u_slab: jax.Array,
             *, block_rows: int = _DEFAULT_BLOCK_ROWS) -> jax.Array:
    """vertices + update on canonical lane-dense slabs (the hot path)."""
    assert v_slab.shape == u_slab.shape, "slab shape mismatch"
    assert v_slab.dtype == u_slab.dtype, "slab dtype mismatch"
    rows, lanes = v_slab.shape
    assert lanes == _LANES, "slab must be lane-dense (rows, 128)"
    sub = _sublane_multiple(v_slab.dtype)
    assert rows % sub == 0, "slab rows must be a sublane multiple (use to_slab)"

    # Block rows: big (amortize ~0.35 us/step), but never bigger than the data.
    br = min(block_rows, rows)
    # v7x: guarantee >= 4 grid steps on medium/large inputs so the "parallel"
    # axis shards the mem-bound add across both TensorCores.
    if rows >= 4 * sub:
        br = min(br, _round_up(pl.cdiv(rows, 4), sub))
    br = max(sub, _round_up(br, sub))
    br = min(br, rows)

    grid = (pl.cdiv(rows, br),)          # last block may be partial; Pallas clamps
    spec = pl.BlockSpec((br, _LANES), lambda i: (i, 0))

    return pl.pallas_call(
        _add_kernel,
        out_shape=jax.ShapeDtypeStruct((rows, _LANES), v_slab.dtype),
        grid=grid,
        in_specs=[spec, spec],
        out_specs=spec,
        compiler_params=pltpu.CompilerParams(
            dimension_semantics=("parallel",)),
    )(v_slab, u_slab)


class VertexModel:
    """JAX/Pallas analog of the PyTorch VertexModel.

    Parameters are stored in the canonical padded slab layout so forward()
    is a single pallas_call with no layout ops on the hot path.
    """

    def __init__(self, vertices: jax.Array, key,
                 *, block_rows: int = _DEFAULT_BLOCK_ROWS):
        self.orig_shape = vertices.shape
        self.total = int(vertices.size)
        self.block_rows = block_rows
        # TODO(synk): jax.random.uniform stands in for torch.rand param init
        # (same distribution, not bit-equivalent).
        update = jax.random.uniform(key, vertices.shape,
                                    dtype=vertices.dtype) * 0.001
        # Pad once at construction; the slab is the canonical parameter layout.
        self.vertices_slab = to_slab(vertices)
        self.update_slab = to_slab(update)

    def forward(self) -> jax.Array:
        """Hot path: returns the lane-dense slab (no pad/reshape/slice)."""
        return slab_add(self.vertices_slab, self.update_slab,
                        block_rows=self.block_rows)

    def forward_vertices(self) -> jax.Array:
        """Convenience: original (N, 3) view of forward(); off the hot path."""
        return from_slab(self.forward(), self.total, self.orig_shape)


def vertex_model_forward(vertices: jax.Array, update: jax.Array,
                         *, block_rows: int = _DEFAULT_BLOCK_ROWS,
                         force_pallas: bool = False) -> jax.Array:
    """Legacy convenience for arbitrary-shaped inputs (per-call layout conversion).

    Prefer VertexModel (canonical slab layout) for repeated calls.
    """
    assert vertices.shape == update.shape, "vertices/update shape mismatch"
    assert vertices.dtype == update.dtype, "vertices/update dtype mismatch"
    if not force_pallas and vertices.size < _FAST_PATH_ELEMS:
        # Tiny input: fused XLA add is already at roofline and avoids the
        # custom-call launch + padding passes entirely.
        return vertices + update
    out_slab = slab_add(to_slab(vertices), to_slab(update),
                        block_rows=block_rows)
    return from_slab(out_slab, int(vertices.size), vertices.shape)


if __name__ == "__main__":
    key = jax.random.PRNGKey(0)
    k_vert, k_upd_model, k_vert2, k_upd2 = jax.random.split(key, 4)

    # --- Demo-scale mesh (matches the PyTorch demo): 128 vertices, xyz.
    N, C = 128, 3
    vertices = jax.random.normal(k_vert, (N, C), dtype=jnp.float32)

    model = VertexModel(vertices, k_upd_model)
    out_slab = jax.block_until_ready(model.forward())           # Pallas hot path
    out = from_slab(out_slab, model.total, model.orig_shape)

    ref = (from_slab(model.vertices_slab, model.total, model.orig_shape)
           + from_slab(model.update_slab, model.total, model.orig_shape))
    assert out.shape == ref.shape and out.dtype == ref.dtype
    assert jnp.allclose(out, ref, atol=1e-6), "mismatch vs reference (small mesh)"

    # --- Multi-block + partial-last-block path: non-divisible size.
    # 5000*3 = 15000 elems -> 118 rows -> padded to 120 -> 4 blocks of 32 rows.
    N2 = 5000
    vertices2 = jax.random.normal(k_vert2, (N2, C), dtype=jnp.float32)
    update2 = jax.random.uniform(k_upd2, (N2, C), dtype=jnp.float32) * 0.001

    out2 = jax.block_until_ready(
        vertex_model_forward(vertices2, update2, block_rows=32,
                             force_pallas=True))
    ref2 = vertices2 + update2
    assert out2.shape == ref2.shape and out2.dtype == ref2.dtype
    assert jnp.allclose(out2, ref2, atol=1e-6), "mismatch vs reference (multi-block)"

    # --- Small-input fast path (no Pallas), for completeness.
    out3 = jax.block_until_ready(vertex_model_forward(vertices2, update2))
    assert jnp.allclose(out3, ref2, atol=1e-6), "mismatch vs reference (fast path)"

    print("KERNEL_OK")
</pallas_src>

<mosaic_0001>
module attributes {stable_mosaic.version = 11 : i64} {
  func.func @_add_kernel(%arg0: i32, %arg1: memref<8x128xf32, #tpu.memory_space<vmem>>, %arg2: memref<8x128xf32, #tpu.memory_space<vmem>>, %arg3: memref<8x128xf32, #tpu.memory_space<vmem>>) attributes {dimension_semantics = [#tpu.dimension_semantics<parallel>], iteration_bounds = array<i64: 1>, scalar_prefetch = 0 : i64, scratch_operands = 0 : i64, tpu.core_type = #tpu.core_type<tc>, window_params = [{transform_indices = @transform_0, window_bounds = array<i64: 8, 128>}, {transform_indices = @transform_1, window_bounds = array<i64: 8, 128>}, {transform_indices = @transform_2, window_bounds = array<i64: 8, 128>}]} {
    %c0 = arith.constant 0 : index
    %c0_0 = arith.constant 0 : index
    %0 = vector.load %arg1[%c0, %c0_0] : memref<8x128xf32, #tpu.memory_space<vmem>>, vector<8x128xf32>
    %c0_1 = arith.constant 0 : index
    %c0_2 = arith.constant 0 : index
    %1 = vector.load %arg2[%c0_1, %c0_2] : memref<8x128xf32, #tpu.memory_space<vmem>>, vector<8x128xf32>
    %2 = arith.addf %0, %1 : vector<8x128xf32>
    %c0_3 = arith.constant 0 : index
    %c0_4 = arith.constant 0 : index
    %3 = vector.load %arg3[%c0_3, %c0_4] : memref<8x128xf32, #tpu.memory_space<vmem>>, vector<8x128xf32>
    tpu.vector_store %arg3[%c0_3, %c0_4], %2 {strides = array<i32>} : memref<8x128xf32, #tpu.memory_space<vmem>>, vector<8x128xf32>,
    return
  }
  func.func @transform_0(%arg0: i32) -> (i32, i32) {
    %c0_i32 = arith.constant 0 : i32
    %c0_i32_0 = arith.constant 0 : i32
    return %arg0, %c0_i32 : i32, i32
  }
  func.func @transform_1(%arg0: i32) -> (i32, i32) {
    %c0_i32 = arith.constant 0 : i32
    %c0_i32_0 = arith.constant 0 : i32
    return %arg0, %c0_i32 : i32, i32
  }
  func.func @transform_2(%arg0: i32) -> (i32, i32) {
    %c0_i32 = arith.constant 0 : i32
    %c0_i32_0 = arith.constant 0 : i32
    return %arg0, %c0_i32 : i32, i32
  }
}

</mosaic_0001>

<llo_original>
// kernel: tpu_custom_call.1
$region0: #{tpu_custom_call.1}
  #allocation0 [shape = 'u32[]', space=smem, size = 0x4, offset = 0x4, fixed_abs, tag = 'smem constant byte address 0x4 - core index']
  #allocation1 [shape = 'u32[72,128]{1,0:T(1,128)}', space=vmem, size = 0x9000, scoped, tag = 'internal scratch']
  %s0 = inlined_call_operand.hbm [shape: f32[8,128], index: 0, kind: input, shape index: {}]
  %s1 = inlined_call_operand.hbm [shape: f32[8,128], index: 1, kind: input, shape index: {}]
  %s2 = inlined_call_operand.hbm [shape: f32[8,128], index: 2, kind: output, shape index: {}]
  %s3 = sld [smem:[#allocation0]]
  $region26: #{tpu_custom_call.1} parent=0
    _
  %s5 = ssub.s32 1, %s3
  %s6 = scalar_select 0, %s5, %s3
  $region1: #{tpu_custom_call.1} parent=0
    #allocation2 [shape = 'u8[4096]{0}', space=vmem, size = 0x1000, scoped, tag = 'input window, operand 0, single buffered']
    #allocation3 [shape = 's32[1]{0}', space=sflag, size = 0x4, scoped, tag = 'scoped memory for tpu_custom_call.1']
    #allocation4 [shape = 's32[1]{0}', space=sflag, size = 0x4, scoped, tag = 'scoped memory for tpu_custom_call.1']
    #allocation5 [shape = 'u8[4096]{0}', space=vmem, size = 0x1000, scoped, tag = 'input window, operand 1, single buffered']
    #allocation6 [shape = 's32[1]{0}', space=sflag, size = 0x4, scoped, tag = 'scoped memory for tpu_custom_call.1']
    #allocation7 [shape = 'u8[4096]{0}', space=vmem, size = 0x1000, scoped, tag = 'output window, operand 0, single buffered']
    %7 = vsyncpa [#allocation3], 0
    %8 = vsyncpa [#allocation6], 0
    %9 = vsyncpa [#allocation4], 0
    // Predicated region
    $region2: #{tpu_custom_call.1} parent=1 // pred_check
      _
    $region3: #{tpu_custom_call.1} parent=1 // pred_check_branch
      %11 = sbr.rel (0) target = $region5
    $region4: #{tpu_custom_call.1} parent=1 // pred_region
      %13 = vsyncadd [#allocation3], 0
      %s15 = sshll.u32 %s0, 4
      %s16 = int_to_ptr.hbm [resolvable:$true] %s15
      %s17 = sshll.u32 [#allocation2], 4
      %s18 = int_to_ptr.vmem [resolvable:$true] %s17
      %20 = dma.hbm_to_vmem [thread:$0]  %s16, 128, %s18, [#allocation3]
    $region5: #{tpu_custom_call.1} parent=1 // pred_fallthru
      _
    // Predicated region
    $region6: #{tpu_custom_call.1} parent=1 // pred_check
      _
    $region7: #{tpu_custom_call.1} parent=1 // pred_check_branch
      %22 = sbr.rel (0) target = $region9
    $region8: #{tpu_custom_call.1} parent=1 // pred_region
      %24 = vsyncadd [#allocation6], 0
      %s26 = sshll.u32 %s1, 4
      %s27 = int_to_ptr.hbm [resolvable:$true] %s26
      %s28 = sshll.u32 [#allocation5], 4
      %s29 = int_to_ptr.vmem [resolvable:$true] %s28
      %31 = dma.hbm_to_vmem [thread:$0]  %s27, 128, %s29, [#allocation6]
    $region9: #{tpu_custom_call.1} parent=1 // pred_fallthru
      _
    // Predicated region
    $region10: #{tpu_custom_call.1} parent=1 // pred_check
      _
    $region11: #{tpu_custom_call.1} parent=1 // pred_check_branch
      %33 = sbr.rel (0) target = $region13
    $region12: #{tpu_custom_call.1} parent=1 // pred_region
      %35 = dma.done [#allocation3], 128
    $region13: #{tpu_custom_call.1} parent=1 // pred_fallthru
      _
    // Predicated region
    $region14: #{tpu_custom_call.1} parent=1 // pred_check
      _
    $region15: #{tpu_custom_call.1} parent=1 // pred_check_branch
      %37 = sbr.rel (0) target = $region17
    $region16: #{tpu_custom_call.1} parent=1 // pred_region
      %39 = dma.done [#allocation6], 128
    $region17: #{tpu_custom_call.1} parent=1 // pred_fallthru
      _
    %v40 = vld [vmem:[#allocation2] sm:$0xff]
    %v41 = vld [vmem:[#allocation5] sm:$0xff]
    %v42 = vadd.f32 %v40, %v41
    %43 = vst [vmem:[#allocation7] sm:$0xff] %v42
    // Predicated region
    $region18: #{tpu_custom_call.1} parent=1 // pred_check
      _
    $region19: #{tpu_custom_call.1} parent=1 // pred_check_branch
      %45 = sbr.rel (0) target = $region21
    $region20: #{tpu_custom_call.1} parent=1 // pred_region
      %47 = vsyncadd [#allocation4], 0
      %s49 = sshll.u32 [#allocation7], 4
      %s50 = int_to_ptr.vmem [resolvable:$true] %s49
      %s51 = sshll.u32 %s2, 4
      %s52 = int_to_ptr.hbm [resolvable:$true] %s51
      %54 = dma.vmem_to_hbm [thread:$0]  %s50, 128, %s52, [#allocation4]
    $region21: #{tpu_custom_call.1} parent=1 // pred_fallthru
      _
    // Predicated region
    $region22: #{tpu_custom_call.1} parent=1 // pred_check
      _
    $region23: #{tpu_custom_call.1} parent=1 // pred_check_branch
      %56 = sbr.rel (0) target = $region25
    $region24: #{tpu_custom_call.1} parent=1 // pred_region
      %58 = dma.done [#allocation4], 128
    $region25: #{tpu_custom_call.1} parent=1 // pred_fallthru
      _
    %59 = vsyncpa [#allocation3], 1
    %60 = vsyncpa [#allocation6], 1
    %61 = vsyncpa [#allocation4], 1

</llo_original>
